<compile_context>
chip_gen: v7x
topology: tpu7x:2x2x1
jax: 0.10.0
libtpu: 0.0.40
codegen_flags: <defaults>
</compile_context>

<pallas_src>
import numpy as np
import jax
import jax.numpy as jnp
from jax.experimental import pallas as pl
from jax.experimental.pallas import tpu as pltpu

FILTER_SIZE = 5                       # PyTorch default
STRIDE = 2                            # PyTorch default
PAD = (FILTER_SIZE - 2) // 2          # = 1
K = FILTER_SIZE - 2                   # effective kernel size = 3
_MAX_STRIP = 32                       # target output rows per grid step


def _hann_filter():
    # Deterministic parameter init, identical to the PyTorch __init__.
    a = np.hanning(FILTER_SIZE)[1:-1]          # [0.5, 1.0, 0.5]
    g = a[:, None] * a[None, :]
    g = g / g.sum()
    return g.astype(np.float32)                # (3, 3), shared by all channels


def _vmem_limit_bytes():
    # ~3/4 of physical VMEM, capped: v5e/v6e (128 MiB) -> 96 MiB, v7x (64) -> 48.
    try:
        cap = int(pltpu.get_tpu_info().vmem_capacity_bytes)
    except Exception:
        cap = 64 * 1024 * 1024
    return int(min(cap * 3 // 4, 100 * 1024 * 1024))


def _pick_strip(ho):
    """Largest divisor of Ho that is <= _MAX_STRIP (whole image if Ho small)."""
    if ho <= _MAX_STRIP:
        return ho
    best = max(d for d in range(1, _MAX_STRIP + 1) if ho % d == 0)
    return best if best >= 8 else ho   # degenerate (near-prime Ho): whole image


@jax.jit
def l2pooling_pallas(x):
    """x: (N, C, H, W) float32 / bf16 -> (N, C, Ho, Wo) same dtype."""
    N, C, H, W = x.shape
    g = _hann_filter()

    Ho = (H + 2 * PAD - K) // STRIDE + 1
    Wo = (W + 2 * PAD - K) // STRIDE + 1

    # ---- layout glue: channels-last + zero pad (one fused copy); the parity
    #      fold below is a pure reshape (no data movement). ----
    xt = jnp.transpose(x, (0, 2, 3, 1))                       # (N, H, W, C)
    Hp, Wp = H + 2 * PAD, W + 2 * PAD
    eh, ew = Hp % 2, Wp % 2                                   # pad to even extents
    xp = jnp.pad(xt, ((0, 0), (PAD, PAD + eh), (PAD, PAD + ew), (0, 0)))
    Hh, Wh = (Hp + eh) // 2, (Wp + ew) // 2                   # Hh = Ho+1, Wh = Wo+1
    C2 = 2 * C
    # element (n, 2*hh+ph, 2*wh+pw, c) -> (n, hh, ph, wh, pw*C + c)
    xr = xp.reshape(N, Hh, 2, Wh, C2)

    TB = _pick_strip(Ho)               # output rows per grid step
    n_strips = Ho // TB
    assert TB * n_strips == Ho

    # ---- kernel: join parity-0 rows with the halo row, then 9 per-tap
    #      square + scale-accumulate passes, sqrt, store. ----
    def kernel(body_ref, halo_ref, o_ref, p0_ref):
        # body_ref: (TB, 2, Wh, 2C)  halo_ref: (1, 2, Wh, 2C)  o_ref: (TB, Wo, C)
        # p0_ref:   (TB+1, Wh, 2C) scratch = this strip's parity-0 padded rows.
        p0_ref[0:TB, :, :] = body_ref[:, 0, :, :]
        p0_ref[TB:TB + 1, :, :] = halo_ref[:, 0, :, :]
        acc = None
        for ky in range(K):
            dy, py = ky // 2, ky % 2
            for kx in range(K):
                dx, px = kx // 2, kx % 2
                # padded row 2*ho+ky -> (row ho+dy, parity py)
                # padded col 2*wo+kx -> (col wo+dx, lanes [px*C:(px+1)*C])
                if py == 0:
                    tap = p0_ref[dy:dy + TB, dx:dx + Wo, px * C:(px + 1) * C]
                else:  # py == 1 -> dy == 0, rows live entirely in the body block
                    tap = body_ref[:, 1, dx:dx + Wo, px * C:(px + 1) * C]
                tap = tap.astype(jnp.float32)
                term = float(g[ky, kx]) * (tap * tap)   # square per tap
                acc = term if acc is None else acc + term
        o_ref[...] = jnp.sqrt(acc + 1e-12).astype(o_ref.dtype)

    in_bytes = xr.size * xr.dtype.itemsize
    out_bytes = N * Ho * Wo * C * jnp.dtype(x.dtype).itemsize

    out_nhwc = pl.pallas_call(
        kernel,
        out_shape=jax.ShapeDtypeStruct((N, Ho, Wo, C), x.dtype),
        grid=(N, n_strips),
        in_specs=[
            # body: TB consecutive folded rows of image n, strip r
            pl.BlockSpec((None, TB, 2, Wh, C2),
                         lambda n, r: (n, r, 0, 0, 0)),
            # halo: the single folded row just below the strip (row (r+1)*TB;
            # always in bounds because Hh = Ho + 1)
            pl.BlockSpec((None, 1, 2, Wh, C2),
                         lambda n, r: (n, (r + 1) * TB, 0, 0, 0)),
        ],
        out_specs=pl.BlockSpec((None, TB, Wo, C),
                               lambda n, r: (n, r, 0, 0)),
        scratch_shapes=[pltpu.VMEM((TB + 1, Wh, C2), x.dtype)],
        compiler_params=pltpu.CompilerParams(
            dimension_semantics=("parallel", "parallel"),
            vmem_limit_bytes=_vmem_limit_bytes()),
        cost_estimate=pl.CostEstimate(
            flops=27 * N * C * Ho * Wo,            # 9 sq + 9 mul + 9 add per output
            transcendentals=N * C * Ho * Wo,       # sqrt
            bytes_accessed=int(in_bytes * (TB + 1) // TB + out_bytes)),
    )(xr, xr)

    return jnp.transpose(out_nhwc, (0, 3, 1, 2))              # back to NCHW


def l2pooling_reference(x):
    """Pure-JAX reference (mirrors F.conv2d with groups=C)."""
    N, C, H, W = x.shape
    g = _hann_filter()
    filt = jnp.asarray(np.tile(g[None, None], (C, 1, 1, 1)), dtype=jnp.float32)
    out = jax.lax.conv_general_dilated(
        (x * x).astype(jnp.float32), filt,
        window_strides=(STRIDE, STRIDE),
        padding=[(PAD, PAD), (PAD, PAD)],
        feature_group_count=C,
        dimension_numbers=("NCHW", "OIHW", "NCHW"))
    return jnp.sqrt(out + 1e-12).astype(x.dtype)


if __name__ == "__main__":
    key = jax.random.PRNGKey(0)
    x = jax.random.normal(key, (2, 4, 16, 16), dtype=jnp.float32)

    out = l2pooling_pallas(x)
    jax.block_until_ready(out)

    ref = l2pooling_reference(x)
    assert out.shape == (2, 4, 8, 8), out.shape
    np.testing.assert_allclose(np.asarray(out), np.asarray(ref),
                               rtol=1e-5, atol=1e-5)
    print("KERNEL_OK")
</pallas_src>

<mosaic_0001>
module attributes {stable_mosaic.version = 11 : i64} {
  func.func @kernel(%arg0: i32, %arg1: i32, %arg2: memref<1x8x2x9x8xf32, #tpu.memory_space<vmem>>, %arg3: memref<1x1x2x9x8xf32, #tpu.memory_space<vmem>>, %arg4: memref<1x8x8x4xf32, #tpu.memory_space<vmem>>, %arg5: memref<9x9x8xf32, #tpu.memory_space<vmem>>) attributes {dimension_semantics = [#tpu.dimension_semantics<parallel>, #tpu.dimension_semantics<parallel>], iteration_bounds = array<i64: 2, 1>, scalar_prefetch = 0 : i64, scratch_operands = 1 : i64, tpu.core_type = #tpu.core_type<tc>, window_params = [{transform_indices = @transform_0, window_bounds = array<i64: 1, 8, 2, 9, 8>}, {transform_indices = @transform_1, window_bounds = array<i64: 1, 1, 2, 9, 8>}, {transform_indices = @transform_2, window_bounds = array<i64: 1, 8, 8, 4>}]} {
    %c0 = arith.constant 0 : index
    %c0_0 = arith.constant 0 : index
    %c0_1 = arith.constant 0 : index
    %c0_2 = arith.constant 0 : index
    %c0_3 = arith.constant 0 : index
    %0 = vector.load %arg2[%c0, %c0_0, %c0_1, %c0_2, %c0_3] : memref<1x8x2x9x8xf32, #tpu.memory_space<vmem>>, vector<1x8x1x9x8xf32>
    %1 = vector.shape_cast %0 : vector<1x8x1x9x8xf32> to vector<8x9x8xf32>
    %c0_4 = arith.constant 0 : index
    %c0_5 = arith.constant 0 : index
    %c0_6 = arith.constant 0 : index
    %2 = vector.load %arg5[%c0_4, %c0_5, %c0_6] : memref<9x9x8xf32, #tpu.memory_space<vmem>>, vector<8x9x8xf32>
    tpu.vector_store %arg5[%c0_4, %c0_5, %c0_6], %1 {strides = array<i32>} : memref<9x9x8xf32, #tpu.memory_space<vmem>>, vector<8x9x8xf32>,
    %c0_7 = arith.constant 0 : index
    %c0_8 = arith.constant 0 : index
    %c0_9 = arith.constant 0 : index
    %c0_10 = arith.constant 0 : index
    %c0_11 = arith.constant 0 : index
    %3 = vector.load %arg3[%c0_7, %c0_8, %c0_9, %c0_10, %c0_11] : memref<1x1x2x9x8xf32, #tpu.memory_space<vmem>>, vector<1x1x1x9x8xf32>
    %4 = vector.shape_cast %3 : vector<1x1x1x9x8xf32> to vector<1x9x8xf32>
    %c8 = arith.constant 8 : index
    %c0_12 = arith.constant 0 : index
    %c0_13 = arith.constant 0 : index
    %5 = vector.load %arg5[%c8, %c0_12, %c0_13] : memref<9x9x8xf32, #tpu.memory_space<vmem>>, vector<1x9x8xf32>
    tpu.vector_store %arg5[%c8, %c0_12, %c0_13], %4 {strides = array<i32>} : memref<9x9x8xf32, #tpu.memory_space<vmem>>, vector<1x9x8xf32>,
    %c0_14 = arith.constant 0 : index
    %c0_15 = arith.constant 0 : index
    %c0_16 = arith.constant 0 : index
    %6 = vector.load %arg5[%c0_14, %c0_15, %c0_16] : memref<9x9x8xf32, #tpu.memory_space<vmem>>, vector<8x8x4xf32>
    %7 = arith.mulf %6, %6 : vector<8x8x4xf32>
    %cst = arith.constant 6.250000e-02 : f32
    %8 = vector.broadcast %cst : f32 to vector<8x8x4xf32>
    %9 = arith.mulf %8, %7 : vector<8x8x4xf32>
    %c0_17 = arith.constant 0 : index
    %c0_18 = arith.constant 0 : index
    %c4 = arith.constant 4 : index
    %10 = vector.load %arg5[%c0_17, %c0_18, %c4] : memref<9x9x8xf32, #tpu.memory_space<vmem>>, vector<8x8x4xf32>
    %11 = arith.mulf %10, %10 : vector<8x8x4xf32>
    %cst_19 = arith.constant 1.250000e-01 : f32
    %12 = vector.broadcast %cst_19 : f32 to vector<8x8x4xf32>
    %13 = arith.mulf %12, %11 : vector<8x8x4xf32>
    %14 = arith.addf %9, %13 : vector<8x8x4xf32>
    %c0_20 = arith.constant 0 : index
    %c1 = arith.constant 1 : index
    %c0_21 = arith.constant 0 : index
    %15 = vector.load %arg5[%c0_20, %c1, %c0_21] : memref<9x9x8xf32, #tpu.memory_space<vmem>>, vector<8x8x4xf32>
    %16 = arith.mulf %15, %15 : vector<8x8x4xf32>
    %cst_22 = arith.constant 6.250000e-02 : f32
    %17 = vector.broadcast %cst_22 : f32 to vector<8x8x4xf32>
    %18 = arith.mulf %17, %16 : vector<8x8x4xf32>
    %19 = arith.addf %14, %18 : vector<8x8x4xf32>
    %c0_23 = arith.constant 0 : index
    %c0_24 = arith.constant 0 : index
    %c1_25 = arith.constant 1 : index
    %c0_26 = arith.constant 0 : index
    %c0_27 = arith.constant 0 : index
    %20 = vector.load %arg2[%c0_23, %c0_24, %c1_25, %c0_26, %c0_27] : memref<1x8x2x9x8xf32, #tpu.memory_space<vmem>>, vector<1x8x1x8x4xf32>
    %21 = vector.shape_cast %20 : vector<1x8x1x8x4xf32> to vector<8x8x4xf32>
    %22 = arith.mulf %21, %21 : vector<8x8x4xf32>
    %cst_28 = arith.constant 1.250000e-01 : f32
    %23 = vector.broadcast %cst_28 : f32 to vector<8x8x4xf32>
    %24 = arith.mulf %23, %22 : vector<8x8x4xf32>
    %25 = arith.addf %19, %24 : vector<8x8x4xf32>
    %c0_29 = arith.constant 0 : index
    %c0_30 = arith.constant 0 : index
    %c1_31 = arith.constant 1 : index
    %c0_32 = arith.constant 0 : index
    %c4_33 = arith.constant 4 : index
    %26 = vector.load %arg2[%c0_29, %c0_30, %c1_31, %c0_32, %c4_33] : memref<1x8x2x9x8xf32, #tpu.memory_space<vmem>>, vector<1x8x1x8x4xf32>
    %27 = vector.shape_cast %26 : vector<1x8x1x8x4xf32> to vector<8x8x4xf32>
    %28 = arith.mulf %27, %27 : vector<8x8x4xf32>
    %cst_34 = arith.constant 2.500000e-01 : f32
    %29 = vector.broadcast %cst_34 : f32 to vector<8x8x4xf32>
    %30 = arith.mulf %29, %28 : vector<8x8x4xf32>
    %31 = arith.addf %25, %30 : vector<8x8x4xf32>
    %c0_35 = arith.constant 0 : index
    %c0_36 = arith.constant 0 : index
    %c1_37 = arith.constant 1 : index
    %c1_38 = arith.constant 1 : index
    %c0_39 = arith.constant 0 : index
    %32 = vector.load %arg2[%c0_35, %c0_36, %c1_37, %c1_38, %c0_39] : memref<1x8x2x9x8xf32, #tpu.memory_space<vmem>>, vector<1x8x1x8x4xf32>
    %33 = vector.shape_cast %32 : vector<1x8x1x8x4xf32> to vector<8x8x4xf32>
    %34 = arith.mulf %33, %33 : vector<8x8x4xf32>
    %cst_40 = arith.constant 1.250000e-01 : f32
    %35 = vector.broadcast %cst_40 : f32 to vector<8x8x4xf32>
    %36 = arith.mulf %35, %34 : vector<8x8x4xf32>
    %37 = arith.addf %31, %36 : vector<8x8x4xf32>
    %c1_41 = arith.constant 1 : index
    %c0_42 = arith.constant 0 : index
    %c0_43 = arith.constant 0 : index
    %38 = vector.load %arg5[%c1_41, %c0_42, %c0_43] : memref<9x9x8xf32, #tpu.memory_space<vmem>>, vector<8x8x4xf32>
    %39 = arith.mulf %38, %38 : vector<8x8x4xf32>
    %cst_44 = arith.constant 6.250000e-02 : f32
    %40 = vector.broadcast %cst_44 : f32 to vector<8x8x4xf32>
    %41 = arith.mulf %40, %39 : vector<8x8x4xf32>
    %42 = arith.addf %37, %41 : vector<8x8x4xf32>
    %c1_45 = arith.constant 1 : index
    %c0_46 = arith.constant 0 : index
    %c4_47 = arith.constant 4 : index
    %43 = vector.load %arg5[%c1_45, %c0_46, %c4_47] : memref<9x9x8xf32, #tpu.memory_space<vmem>>, vector<8x8x4xf32>
    %44 = arith.mulf %43, %43 : vector<8x8x4xf32>
    %cst_48 = arith.constant 1.250000e-01 : f32
    %45 = vector.broadcast %cst_48 : f32 to vector<8x8x4xf32>
    %46 = arith.mulf %45, %44 : vector<8x8x4xf32>
    %47 = arith.addf %42, %46 : vector<8x8x4xf32>
    %c1_49 = arith.constant 1 : index
    %c1_50 = arith.constant 1 : index
    %c0_51 = arith.constant 0 : index
    %48 = vector.load %arg5[%c1_49, %c1_50, %c0_51] : memref<9x9x8xf32, #tpu.memory_space<vmem>>, vector<8x8x4xf32>
    %49 = arith.mulf %48, %48 : vector<8x8x4xf32>
    %cst_52 = arith.constant 6.250000e-02 : f32
    %50 = vector.broadcast %cst_52 : f32 to vector<8x8x4xf32>
    %51 = arith.mulf %50, %49 : vector<8x8x4xf32>
    %52 = arith.addf %47, %51 : vector<8x8x4xf32>
    %cst_53 = arith.constant 9.99999996E-13 : f32
    %53 = vector.broadcast %cst_53 : f32 to vector<8x8x4xf32>
    %54 = arith.addf %52, %53 : vector<8x8x4xf32>
    %55 = math.sqrt %54 : vector<8x8x4xf32>
    %c0_54 = arith.constant 0 : index
    %c0_55 = arith.constant 0 : index
    %c0_56 = arith.constant 0 : index
    %c0_57 = arith.constant 0 : index
    %56 = vector.load %arg4[%c0_54, %c0_55, %c0_56, %c0_57] : memref<1x8x8x4xf32, #tpu.memory_space<vmem>>, vector<1x8x8x4xf32>
    %57 = vector.shape_cast %56 : vector<1x8x8x4xf32> to vector<8x8x4xf32>
    %58 = vector.shape_cast %55 : vector<8x8x4xf32> to vector<1x8x8x4xf32>
    tpu.vector_store %arg4[%c0_54, %c0_55, %c0_56, %c0_57], %58 {strides = array<i32>} : memref<1x8x8x4xf32, #tpu.memory_space<vmem>>, vector<1x8x8x4xf32>,
    return
  }
  func.func @transform_0(%arg0: i32, %arg1: i32) -> (i32, i32, i32, i32, i32) {
    %c0_i32 = arith.constant 0 : i32
    %c0_i32_0 = arith.constant 0 : i32
    %c0_i32_1 = arith.constant 0 : i32
    %c0_i32_2 = arith.constant 0 : i32
    return %arg0, %arg1, %c0_i32, %c0_i32_0, %c0_i32_1 : i32, i32, i32, i32, i32
  }
  func.func @transform_1(%arg0: i32, %arg1: i32) -> (i32, i32, i32, i32, i32) {
    %c1_i32 = arith.constant 1 : i32
    %0 = arith.addi %arg1, %c1_i32 : i32
    %c8_i32 = arith.constant 8 : i32
    %1 = arith.muli %0, %c8_i32 : i32
    %c0_i32 = arith.constant 0 : i32
    %c0_i32_0 = arith.constant 0 : i32
    %c0_i32_1 = arith.constant 0 : i32
    %c0_i32_2 = arith.constant 0 : i32
    return %arg0, %1, %c0_i32, %c0_i32_0, %c0_i32_1 : i32, i32, i32, i32, i32
  }
  func.func @transform_2(%arg0: i32, %arg1: i32) -> (i32, i32, i32, i32) {
    %c0_i32 = arith.constant 0 : i32
    %c0_i32_0 = arith.constant 0 : i32
    %c0_i32_1 = arith.constant 0 : i32
    return %arg0, %arg1, %c0_i32, %c0_i32_0 : i32, i32, i32, i32
  }
}

</mosaic_0001>

<llo_original>
// kernel: l2pooling_pallas.1
$region0: #{l2pooling_pallas.1}
  #allocation0 [shape = 'u32[]', space=smem, size = 0x4, offset = 0x4, fixed_abs, tag = 'smem constant byte address 0x4 - core index']
  #allocation1 [shape = 'u32[144,128]{1,0:T(1,128)}', space=vmem, size = 0x12000, scoped, tag = 'internal scratch']
  #allocation2 [shape = 'f32[9,9,8]{2,1,0:T(8,128)}', space=vmem, size = 0x12000, scoped, tag = 'scratch operand']
  %s0 = inlined_call_operand.vmem [shape: f32[2,9,2,9,8], index: 0, kind: input, shape index: {}, may-alias: {0,1}]
  %s1 = inlined_call_operand.vmem [shape: f32[2,9,2,9,8], index: 1, kind: input, shape index: {}, may-alias: {0,1}]
  %s2 = inlined_call_operand.vmem [shape: f32[2,8,8,4], index: 2, kind: output, shape index: {}]
  %s3 = sld [smem:[#allocation0]]
  $region41: #{l2pooling_pallas.1} parent=0
    _
  %s5 = ssub.s32 1, %s3
  %s6 = scalar_select 0, %s5, %s3
  loop: start=0, step=1, limit=4
  $region2: #{l2pooling_pallas.1} parent=0 // loop_pre_header
    _
  $region3: #{l2pooling_pallas.1} parent=0 // loop_header
    %s8 = sphi 0, %s12
    %p9 = scmp.ge.s32.totalorder %s8, 4
    %s15 = sphi 0, %s27
    %s16 = sphi 0, %s23
    %s17 = sphi 0, %s15
    %s18 = sphi 0, %s16
    %s19 = sphi 0, %s17
    %s20 = sphi 0, %s18
    %s32 = sphi 0, %s34
    %s35 = sphi 0, %s32
    %s36 = sphi 0, %s35
    %s52 = sphi 0, %s36
    %s64 = sphi 0, %s66
    %s67 = sphi 0, %s64
    %s68 = sphi 0, %s67
    %s84 = sphi 0, %s68
    %s92 = sphi 0, %s94
    %s95 = sphi 0, %s92
    %s96 = sphi 0, %s95
    %s112 = sphi 0, %s96
  $region4: #{l2pooling_pallas.1} parent=0 // loop_header_branch
    %11 = sbr.rel (%p9) target = $region8
  $region5: #{l2pooling_pallas.1} parent=0 // loop_body
    %s13 = ssub.s32 %s8, 1
    %s14 = ssub.s32 %s8, 2
    %s21 = sadd.s32 1, %s16
    %p22 = scmp.ge.s32.totalorder %s21, 1
    %s23 = scalar_select %p22, 0, %s21
    %s24 = sadd.s32 1, %s15
    %s25 = scalar_select %p22, %s24, %s15
    %p26 = scmp.ge.s32.totalorder %s25, 2
    %s27 = scalar_select %p26, 0, %s25
    %s28 = ssub.s32 %s15, %s27
    %s29 = ssub.s32 %s16, %s23
    %s30 = sor.u32 %s28, %s29
    %p31 = scmp.eq.s32.totalorder %s30, 0
    %s33 = sadd.s32 %s32, 1
    %s34 = scalar_select %p31, %s32, %s33
    %p37 = pneg %p31
    %p38 = scmp.eq.s32.totalorder %s8, 1
    %p39 = por %p37, %p38
    %p40 = scmp.ne.s32.totalorder %s32, %s35
    %p41 = scmp.eq.s32.totalorder %s8, 0
    %p42 = por %p40, %p41
    %p43 = scmp.ne.s32.totalorder %s32, %s35
    %p44 = scmp.eq.s32.totalorder %s13, 1
    %p45 = por %p43, %p44
    %p46 = scmp.ne.s32.totalorder %s35, %s36
    %p47 = scmp.eq.s32.totalorder %s13, 0
    %p48 = por %p46, %p47
    %p49 = scmp.ne.s32.totalorder %s35, %s36
    %p50 = scmp.eq.s32.totalorder %s14, 1
    %p51 = por %p49, %p50
    %p53 = scmp.ne.s32.totalorder %s36, %s52
    %p54 = scmp.eq.s32.totalorder %s14, 0
    %p55 = por %p53, %p54
    %s56 = sadd.s32 %s16, 1
    %s57 = smul.u32 %s56, 8
    %s58 = sadd.s32 %s23, 1
    %s59 = smul.u32 %s58, 8
    %s60 = ssub.s32 %s15, %s27
    %s61 = ssub.s32 %s57, %s59
    %s62 = sor.u32 %s60, %s61
    %p63 = scmp.eq.s32.totalorder %s62, 0
    %s65 = sadd.s32 %s64, 1
    %s66 = scalar_select %p63, %s64, %s65
    %p69 = pneg %p63
    %p70 = scmp.eq.s32.totalorder %s8, 1
    %p71 = por %p69, %p70
    %p72 = scmp.ne.s32.totalorder %s64, %s67
    %p73 = scmp.eq.s32.totalorder %s8, 0
    %p74 = por %p72, %p73
    %p75 = scmp.ne.s32.totalorder %s64, %s67
    %p76 = scmp.eq.s32.totalorder %s13, 1
    %p77 = por %p75, %p76
    %p78 = scmp.ne.s32.totalorder %s67, %s68
    %p79 = scmp.eq.s32.totalorder %s13, 0
    %p80 = por %p78, %p79
    %p81 = scmp.ne.s32.totalorder %s67, %s68
    %p82 = scmp.eq.s32.totalorder %s14, 1
    %p83 = por %p81, %p82
    %p85 = scmp.ne.s32.totalorder %s68, %s84
    %p86 = scmp.eq.s32.totalorder %s14, 0
    %p87 = por %p85, %p86
    %s88 = ssub.s32 %s15, %s27
    %s89 = ssub.s32 %s16, %s23
    %s90 = sor.u32 %s88, %s89
    %p91 = scmp.eq.s32.totalorder %s90, 0
    %s93 = sadd.s32 %s92, 1
    %s94 = scalar_select %p91, %s92, %s93
    %p97 = pneg %p91
    %p98 = scmp.eq.s32.totalorder %s8, 1
    %p99 = por %p97, %p98
    %p100 = scmp.ne.s32.totalorder %s92, %s95
    %p101 = scmp.eq.s32.totalorder %s8, 0
    %p102 = por %p100, %p101
    %p103 = scmp.ne.s32.totalorder %s92, %s95
    %p104 = scmp.eq.s32.totalorder %s13, 1
    %p105 = por %p103, %p104
    %p106 = scmp.ne.s32.totalorder %s95, %s96
    %p107 = scmp.eq.s32.totalorder %s13, 0
    %p108 = por %p106, %p107
    %p109 = scmp.ne.s32.totalorder %s95, %s96
    %p110 = scmp.eq.s32.totalorder %s14, 1
    %p111 = por %p109, %p110
    %p113 = scmp.ne.s32.totalorder %s96, %s112
    %p114 = scmp.eq.s32.totalorder %s14, 0
    %p115 = por %p113, %p114
    %p116 = scmp.le.s32.totalorder 1, %s8
    %p117 = scmp.lt.s32.totalorder %s8, 3
    %p118 = pnand %p116, %p117
    %p119 = pneg %p118
    // Predicated region
    $region9: #{l2pooling_pallas.1} parent=5 // pred_check
      _
    $region10: #{l2pooling_pallas.1} parent=5 // pred_check_branch
      %121 = sbr.rel (%p118) target = $region12
    $region11: #{l2pooling_pallas.1} parent=5 // pred_region
      %s122 = ssub.s32 %s8, 1
    $region12: #{l2pooling_pallas.1} parent=5 // pred_fallthru
      _
    %p123 = scmp.lt.s32.totalorder %s8, 2
    // Predicated region
    $region13: #{l2pooling_pallas.1} parent=5 // pred_check
      %p124 = pneg %p123
    $region14: #{l2pooling_pallas.1} parent=5 // pred_check_branch
      %126 = sbr.rel (%p124) target = $region16
    $region15: #{l2pooling_pallas.1} parent=5 // pred_region
      // Predicated region
      $region17: #{l2pooling_pallas.1} parent=15 // pred_check
        %p127 = pneg %p42
      $region18: #{l2pooling_pallas.1} parent=15 // pred_check_branch
        %129 = sbr.rel (%p127) target = $region20
      $region19: #{l2pooling_pallas.1} parent=15 // pred_region
        %s130 = smul.u32 8, %s16
        %s131 = ssub.s32 9, %s130
        %p132 = scmp.lt.s32.totalorder %s131, 8
        %s133 = scalar_select %p132, %s131, 8
        %s134 = smul.u32 128, %s133
        %s135 = smul.u32 %s134, 2
        %s136 = smul.u32 %s135, 2
        %p137 = scmp.lt.s32.totalorder %s15, 1
        %s138 = scalar_select %p137, %s15, 1
        %p139 = scmp.lt.s32.totalorder %s130, 8
        %s140 = scalar_select %p139, %s130, 8
        %s141 = smul.addr %s140, 4
        %s142 = smul.addr %s138, 36
        %s143 = sadd.s32 %s141, %s142
        %s144 = smul.addr %s143, 8
        %s145 = scalar_lea.vmem %s0, %s144
        %s146 = smul.u32 8, %s16
        %s147 = ssub.s32 9, %s146
        %p148 = scmp.lt.s32.totalorder %s147, 8
        %s149 = scalar_select %p148, %s147, 8
        %s150 = smul.u32 128, %s149
        %s151 = smul.u32 %s150, 2
        %s152 = smul.u32 %s151, 2
      $region20: #{l2pooling_pallas.1} parent=15 // pred_fallthru
        _
      // Predicated region
      $region21: #{l2pooling_pallas.1} parent=15 // pred_check
        %p153 = pneg %p74
      $region22: #{l2pooling_pallas.1} parent=15 // pred_check_branch
        %155 = sbr.rel (%p153) target = $region24
      $region23: #{l2pooling_pallas.1} parent=15 // pred_region
        %s156 = sadd.s32 %s16, 1
        %s157 = smul.u32 %s156, 8
        %p158 = scmp.lt.s32.totalorder %s15, 1
        %s159 = scalar_select %p158, %s15, 1
        %p160 = scmp.lt.s32.totalorder %s157, 8
        %s161 = scalar_select %p160, %s157, 8
        %s162 = smul.addr %s161, 4
        %s163 = smul.addr %s159, 36
        %s164 = sadd.s32 %s162, %s163
        %s165 = smul.addr %s164, 8
        %s166 = scalar_lea.vmem %s1, %s165
        %s167 = sadd.s32 %s16, 1
        %s168 = smul.u32 %s167, 8
      $region24: #{l2pooling_pallas.1} parent=15 // pred_fallthru
        _
    $region16: #{l2pooling_pallas.1} parent=5 // pred_fallthru
      _
    %p169 = scmp.le.s32.totalorder 1, %s8
    %p170 = scmp.lt.s32.totalorder %s8, 3
    %p171 = pnand %p169, %p170
    %p172 = pneg %p171
    // Predicated region
    $region25: #{l2pooling_pallas.1} parent=5 // pred_check
      _
    $region26: #{l2pooling_pallas.1} parent=5 // pred_check_branch
      %174 = sbr.rel (%p171) target = $region28
    $region27: #{l2pooling_pallas.1} parent=5 // pred_region
      %s175 = ssub.s32 %s8, 1
      %s176 = smul.u32 8, %s18
      %s177 = ssub.s32 9, %s176
      %p178 = scmp.lt.s32.totalorder %s177, 8
      %s179 = scalar_select %p178, %s177, 8
      %s180 = smul.u32 128, %s179
      %s181 = smul.u32 %s180, 2
      %s182 = smul.u32 %s181, 2
      %p183 = scmp.lt.s32.totalorder %s17, 1
      %s184 = scalar_select %p183, %s17, 1
      %p185 = scmp.lt.s32.totalorder %s176, 8
      %s186 = scalar_select %p185, %s176, 8
      %s187 = smul.addr %s186, 4
      %s188 = smul.addr %s184, 36
      %s189 = sadd.s32 %s187, %s188
      %s190 = smul.addr %s189, 8
      %s191 = scalar_lea.vmem %s0, %s190
      %p192 = pneg %p48
      %p193 = pneg %p45
      %s194 = sadd.s32 %s18, 1
      %s195 = smul.u32 %s194, 8
      %p196 = scmp.lt.s32.totalorder %s17, 1
      %s197 = scalar_select %p196, %s17, 1
      %p198 = scmp.lt.s32.totalorder %s195, 8
      %s199 = scalar_select %p198, %s195, 8
      %s200 = smul.addr %s199, 4
      %s201 = smul.addr %s197, 36
      %s202 = sadd.s32 %s200, %s201
      %s203 = smul.addr %s202, 8
      %s204 = scalar_lea.vmem %s1, %s203
      %p205 = pneg %p80
      %p206 = pneg %p77
      %p207 = pneg %p108
      %p208 = pneg %p105
      %s209 = smul.u32 8, %s18
      %p210 = scmp.lt.s32.totalorder %s17, 1
      %s211 = scalar_select %p210, %s17, 1
      %p212 = scmp.lt.s32.totalorder %s209, 7
      %s213 = scalar_select %p212, %s209, 7
      %s214 = smul.addr %s211, 8
      %s215 = sadd.s32 %s213, %s214
      %s216 = smul.addr %s215, 8
      %s217 = scalar_lea.vmem %s2, %s216
      %s218 = smul.u32 8, %s18
      %s219 = ssub.s32 9, %s218
      %p220 = scmp.lt.s32.totalorder %s219, 8
      %s221 = scalar_select %p220, %s219, 8
      %s222 = smul.u32 128, %s221
      %s223 = smul.u32 %s222, 2
      %s224 = smul.u32 %s223, 2
      %p225 = scmp.lt.s32.totalorder %s17, 1
      %s226 = scalar_select %p225, %s17, 1
      %p227 = scmp.lt.s32.totalorder %s218, 8
      %s228 = scalar_select %p227, %s218, 8
      %s229 = smul.addr %s228, 4
      %s230 = smul.addr %s226, 36
      %s231 = sadd.s32 %s229, %s230
      %s232 = smul.addr %s231, 8
      %s233 = scalar_lea.vmem %s0, %s232
      %s234 = smul.u32 8, %s18
      %s235 = ssub.s32 9, %s234
      %p236 = scmp.lt.s32.totalorder %s235, 8
      %s237 = scalar_select %p236, %s235, 8
      %s238 = smul.u32 128, %s237
      %s239 = smul.u32 %s238, 2
      %s240 = smul.u32 %s239, 2
      %s241 = sadd.s32 %s18, 1
      %s242 = smul.u32 %s241, 8
      %p243 = scmp.lt.s32.totalorder %s17, 1
      %s244 = scalar_select %p243, %s17, 1
      %p245 = scmp.lt.s32.totalorder %s242, 8
      %s246 = scalar_select %p245, %s242, 8
      %s247 = smul.addr %s246, 4
      %s248 = smul.addr %s244, 36
      %s249 = sadd.s32 %s247, %s248
      %s250 = smul.addr %s249, 8
      %s251 = scalar_lea.vmem %s1, %s250
      %s252 = sadd.s32 %s18, 1
      %s253 = smul.u32 %s252, 8
      %s254 = smul.u32 8, %s18
      %p255 = scmp.lt.s32.totalorder %s17, 1
      %s256 = scalar_select %p255, %s17, 1
      %p257 = scmp.lt.s32.totalorder %s254, 7
      %s258 = scalar_select %p257, %s254, 7
      %s259 = smul.addr %s256, 8
      %s260 = sadd.s32 %s258, %s259
      %s261 = smul.addr %s260, 8
      %s262 = scalar_lea.vmem %s2, %s261
      %s263 = smul.u32 8, %s18
      %v264 = vld [vmem:[%s233] sm:$0xff]
      %v265 = vld [vmem:[%s233 + $0x8] sm:$0x1]
      %v266 = vld [vmem:[%s233 + $0x20] sm:$0xff]
      %v267 = vld [vmem:[%s233 + $0x28] sm:$0x1]
      %v268 = vld [vmem:[%s233 + $0x40] sm:$0xff]
      %v269 = vld [vmem:[%s233 + $0x48] sm:$0x1]
      %v270 = vld [vmem:[%s233 + $0x60] sm:$0xff]
      %v271 = vld [vmem:[%s233 + $0x68] sm:$0x1]
      %v272 = vld [vmem:[%s233 + $0x80] sm:$0xff]
      %v273 = vld [vmem:[%s233 + $0x88] sm:$0x1]
      %v274 = vld [vmem:[%s233 + $0xa0] sm:$0xff]
      %v275 = vld [vmem:[%s233 + $0xa8] sm:$0x1]
      %v276 = vld [vmem:[%s233 + $0xc0] sm:$0xff]
      %v277 = vld [vmem:[%s233 + $0xc8] sm:$0x1]
      %v278 = vld [vmem:[%s233 + $0xe0] sm:$0xff]
      %v279 = vld [vmem:[%s233 + $0xe8] sm:$0x1]
      %vm280 = vcmask 64512
      %281 = vst.msk [vmem:[#allocation2] sm:$0xff] %vm280, %v264
      %vm282 = vcmask 57344
      %283 = vst.msk [vmem:[#allocation2 + $0x8] sm:$0x1] %vm282, %v265
      %284 = vst.msk [vmem:[#allocation2 + $0x10] sm:$0xff] %vm280, %v266
      %285 = vst.msk [vmem:[#allocation2 + $0x18] sm:$0x1] %vm282, %v267
      %286 = vst.msk [vmem:[#allocation2 + $0x20] sm:$0xff] %vm280, %v268
      %287 = vst.msk [vmem:[#allocation2 + $0x28] sm:$0x1] %vm282, %v269
      %288 = vst.msk [vmem:[#allocation2 + $0x30] sm:$0xff] %vm280, %v270
      %289 = vst.msk [vmem:[#allocation2 + $0x38] sm:$0x1] %vm282, %v271
      %290 = vst.msk [vmem:[#allocation2 + $0x40] sm:$0xff] %vm280, %v272
      %291 = vst.msk [vmem:[#allocation2 + $0x48] sm:$0x1] %vm282, %v273
      %292 = vst.msk [vmem:[#allocation2 + $0x50] sm:$0xff] %vm280, %v274
      %293 = vst.msk [vmem:[#allocation2 + $0x58] sm:$0x1] %vm282, %v275
      %294 = vst.msk [vmem:[#allocation2 + $0x60] sm:$0xff] %vm280, %v276
      %295 = vst.msk [vmem:[#allocation2 + $0x68] sm:$0x1] %vm282, %v277
      %296 = vst.msk [vmem:[#allocation2 + $0x70] sm:$0xff] %vm280, %v278
      %297 = vst.msk [vmem:[#allocation2 + $0x78] sm:$0x1] %vm282, %v279
      %v298 = vld [vmem:[%s251] sm:$0xff]
      %v299 = vld [vmem:[%s251 + $0x8] sm:$0x1]
      %s300 = scalar_lea.vmem [#allocation2], 128
      %301 = vst.msk [vmem:[%s300] sm:$0xff] %vm280, %v298
      %302 = vst.msk [vmem:[%s300 + $0x8] sm:$0x1] %vm282, %v299
      %v303 = vld [vmem:[#allocation2] sm:$0xff]
      %v304 = vld [vmem:[#allocation2 + $0x10] sm:$0xff]
      %v305 = vld [vmem:[#allocation2 + $0x20] sm:$0xff]
      %v306 = vld [vmem:[#allocation2 + $0x30] sm:$0xff]
      %v307 = vld [vmem:[#allocation2 + $0x40] sm:$0xff]
      %v308 = vld [vmem:[#allocation2 + $0x50] sm:$0xff]
      %v309 = vld [vmem:[#allocation2 + $0x60] sm:$0xff]
      %v310 = vld [vmem:[#allocation2 + $0x70] sm:$0xff]
      %v311 = vmul.f32 %v303, %v303
      %v312 = vmul.f32 %v304, %v304
      %v313 = vmul.f32 %v305, %v305
      %v314 = vmul.f32 %v306, %v306
      %v315 = vmul.f32 %v307, %v307
      %v316 = vmul.f32 %v308, %v308
      %v317 = vmul.f32 %v309, %v309
      %v318 = vmul.f32 %v310, %v310
      %v319 = vmul.f32 %v311, 0.0625
      %v320 = vmul.f32 %v312, 0.0625
      %v321 = vmul.f32 %v313, 0.0625
      %v322 = vmul.f32 %v314, 0.0625
      %v323 = vmul.f32 %v315, 0.0625
      %v324 = vmul.f32 %v316, 0.0625
      %v325 = vmul.f32 %v317, 0.0625
      %v326 = vmul.f32 %v318, 0.0625
      %v327 = vmul.f32 %v311, 0.125
      %v328 = vmul.f32 %v312, 0.125
      %v329 = vmul.f32 %v313, 0.125
      %v330 = vmul.f32 %v314, 0.125
      %v331 = vmul.f32 %v315, 0.125
      %v332 = vmul.f32 %v316, 0.125
      %v333 = vmul.f32 %v317, 0.125
      %v334 = vmul.f32 %v318, 0.125
      %343 = vrot.lane.b32.xlu0 %v327, 124
      %v344 = vpop.permute.xlu0 %343
      %345 = vrot.lane.b32.xlu0 %v328, 124
      %v346 = vpop.permute.xlu0 %345
      %347 = vrot.lane.b32.xlu0 %v329, 124
      %v348 = vpop.permute.xlu0 %347
      %349 = vrot.lane.b32.xlu0 %v330, 124
      %v350 = vpop.permute.xlu0 %349
      %351 = vrot.lane.b32.xlu0 %v331, 124
      %v352 = vpop.permute.xlu0 %351
      %353 = vrot.lane.b32.xlu0 %v332, 124
      %v354 = vpop.permute.xlu0 %353
      %355 = vrot.lane.b32.xlu0 %v333, 124
      %v356 = vpop.permute.xlu0 %355
      %357 = vrot.lane.b32.xlu0 %v334, 124
      %v358 = vpop.permute.xlu0 %357
      %v367 = vadd.f32 %v319, %v344
      %v368 = vadd.f32 %v320, %v346
      %v369 = vadd.f32 %v321, %v348
      %v370 = vadd.f32 %v322, %v350
      %v371 = vadd.f32 %v323, %v352
      %v372 = vadd.f32 %v324, %v354
      %v373 = vadd.f32 %v325, %v356
      %v374 = vadd.f32 %v326, %v358
      %v375 = vld [vmem:[#allocation2 + $0x1] sm:$0xff]
      %v376 = vld [vmem:[#allocation2 + $0x11] sm:$0xff]
      %v377 = vld [vmem:[#allocation2 + $0x21] sm:$0xff]
      %v378 = vld [vmem:[#allocation2 + $0x31] sm:$0xff]
      %v379 = vld [vmem:[#allocation2 + $0x41] sm:$0xff]
      %v380 = vld [vmem:[#allocation2 + $0x51] sm:$0xff]
      %v381 = vld [vmem:[#allocation2 + $0x61] sm:$0xff]
      %v382 = vld [vmem:[#allocation2 + $0x71] sm:$0xff]
      %v383 = vmul.f32 %v375, %v375
      %v384 = vmul.f32 %v376, %v376
      %v385 = vmul.f32 %v377, %v377
      %v386 = vmul.f32 %v378, %v378
      %v387 = vmul.f32 %v379, %v379
      %v388 = vmul.f32 %v380, %v380
      %v389 = vmul.f32 %v381, %v381
      %v390 = vmul.f32 %v382, %v382
      %v391 = vmul.f32 %v383, 0.0625
      %v392 = vmul.f32 %v384, 0.0625
      %v393 = vmul.f32 %v385, 0.0625
      %v394 = vmul.f32 %v386, 0.0625
      %v395 = vmul.f32 %v387, 0.0625
      %v396 = vmul.f32 %v388, 0.0625
      %v397 = vmul.f32 %v389, 0.0625
      %v398 = vmul.f32 %v390, 0.0625
      %v399 = vadd.f32 %v367, %v391
      %v400 = vadd.f32 %v368, %v392
      %v401 = vadd.f32 %v369, %v393
      %v402 = vadd.f32 %v370, %v394
      %v403 = vadd.f32 %v371, %v395
      %v404 = vadd.f32 %v372, %v396
      %v405 = vadd.f32 %v373, %v397
      %v406 = vadd.f32 %v374, %v398
      %s407 = scalar_lea.vmem %s233, 16
      %v408 = vld [vmem:[%s407] sm:$0xff]
      %v409 = vld [vmem:[%s407 + $0x20] sm:$0xff]
      %v410 = vld [vmem:[%s407 + $0x40] sm:$0xff]
      %v411 = vld [vmem:[%s407 + $0x60] sm:$0xff]
      %v412 = vld [vmem:[%s407 + $0x80] sm:$0xff]
      %v413 = vld [vmem:[%s407 + $0xa0] sm:$0xff]
      %v414 = vld [vmem:[%s407 + $0xc0] sm:$0xff]
      %v415 = vld [vmem:[%s407 + $0xe0] sm:$0xff]
      %v416 = vmul.f32 %v408, %v408
      %v417 = vmul.f32 %v409, %v409
      %v418 = vmul.f32 %v410, %v410
      %v419 = vmul.f32 %v411, %v411
      %v420 = vmul.f32 %v412, %v412
      %v421 = vmul.f32 %v413, %v413
      %v422 = vmul.f32 %v414, %v414
      %v423 = vmul.f32 %v415, %v415
      %v424 = vmul.f32 %v416, 0.125
      %v425 = vmul.f32 %v417, 0.125
      %v426 = vmul.f32 %v418, 0.125
      %v427 = vmul.f32 %v419, 0.125
      %v428 = vmul.f32 %v420, 0.125
      %v429 = vmul.f32 %v421, 0.125
      %v430 = vmul.f32 %v422, 0.125
      %v431 = vmul.f32 %v423, 0.125
      %v432 = vadd.f32 %v399, %v424
      %v433 = vadd.f32 %v400, %v425
      %v434 = vadd.f32 %v401, %v426
      %v435 = vadd.f32 %v402, %v427
      %v436 = vadd.f32 %v403, %v428
      %v437 = vadd.f32 %v404, %v429
      %v438 = vadd.f32 %v405, %v430
      %v439 = vadd.f32 %v406, %v431
      %v440 = vmul.f32 %v416, 0.25
      %v441 = vmul.f32 %v417, 0.25
      %v442 = vmul.f32 %v418, 0.25
      %v443 = vmul.f32 %v419, 0.25
      %v444 = vmul.f32 %v420, 0.25
      %v445 = vmul.f32 %v421, 0.25
      %v446 = vmul.f32 %v422, 0.25
      %v447 = vmul.f32 %v423, 0.25
      %456 = vrot.lane.b32.xlu0 %v440, 124
      %v457 = vpop.permute.xlu0 %456
      %458 = vrot.lane.b32.xlu0 %v441, 124
      %v459 = vpop.permute.xlu0 %458
      %460 = vrot.lane.b32.xlu0 %v442, 124
      %v461 = vpop.permute.xlu0 %460
      %462 = vrot.lane.b32.xlu0 %v443, 124
      %v463 = vpop.permute.xlu0 %462
      %464 = vrot.lane.b32.xlu0 %v444, 124
      %v465 = vpop.permute.xlu0 %464
      %466 = vrot.lane.b32.xlu0 %v445, 124
      %v467 = vpop.permute.xlu0 %466
      %468 = vrot.lane.b32.xlu0 %v446, 124
      %v469 = vpop.permute.xlu0 %468
      %470 = vrot.lane.b32.xlu0 %v447, 124
      %v471 = vpop.permute.xlu0 %470
      %v480 = vadd.f32 %v432, %v457
      %v481 = vadd.f32 %v433, %v459
      %v482 = vadd.f32 %v434, %v461
      %v483 = vadd.f32 %v435, %v463
      %v484 = vadd.f32 %v436, %v465
      %v485 = vadd.f32 %v437, %v467
      %v486 = vadd.f32 %v438, %v469
      %v487 = vadd.f32 %v439, %v471
      %v488 = vld [vmem:[%s407 + $0x1] sm:$0xff]
      %v489 = vld [vmem:[%s407 + $0x21] sm:$0xff]
      %v490 = vld [vmem:[%s407 + $0x41] sm:$0xff]
      %v491 = vld [vmem:[%s407 + $0x61] sm:$0xff]
      %v492 = vld [vmem:[%s407 + $0x81] sm:$0xff]
      %v493 = vld [vmem:[%s407 + $0xa1] sm:$0xff]
      %v494 = vld [vmem:[%s407 + $0xc1] sm:$0xff]
      %v495 = vld [vmem:[%s407 + $0xe1] sm:$0xff]
      %v496 = vmul.f32 %v488, %v488
      %v497 = vmul.f32 %v489, %v489
      %v498 = vmul.f32 %v490, %v490
      %v499 = vmul.f32 %v491, %v491
      %v500 = vmul.f32 %v492, %v492
      %v501 = vmul.f32 %v493, %v493
      %v502 = vmul.f32 %v494, %v494
      %v503 = vmul.f32 %v495, %v495
      %v504 = vmul.f32 %v496, 0.125
      %v505 = vmul.f32 %v497, 0.125
      %v506 = vmul.f32 %v498, 0.125
      %v507 = vmul.f32 %v499, 0.125
      %v508 = vmul.f32 %v500, 0.125
      %v509 = vmul.f32 %v501, 0.125
      %v510 = vmul.f32 %v502, 0.125
      %v511 = vmul.f32 %v503, 0.125
      %v512 = vadd.f32 %v480, %v504
      %v513 = vadd.f32 %v481, %v505
      %v514 = vadd.f32 %v482, %v506
      %v515 = vadd.f32 %v483, %v507
      %v516 = vadd.f32 %v484, %v508
      %v517 = vadd.f32 %v485, %v509
      %v518 = vadd.f32 %v486, %v510
      %v519 = vadd.f32 %v487, %v511
      %s520 = scalar_lea.vmem [#allocation2], 16
      %v521 = vld [vmem:[%s520] sm:$0xff]
      %v522 = vld [vmem:[%s520 + $0x10] sm:$0xff]
      %v523 = vld [vmem:[%s520 + $0x20] sm:$0xff]
      %v524 = vld [vmem:[%s520 + $0x30] sm:$0xff]
      %v525 = vld [vmem:[%s520 + $0x40] sm:$0xff]
      %v526 = vld [vmem:[%s520 + $0x50] sm:$0xff]
      %v527 = vld [vmem:[%s520 + $0x60] sm:$0xff]
      %v528 = vld [vmem:[%s520 + $0x70] sm:$0xff]
      %v529 = vmul.f32 %v521, %v521
      %v530 = vmul.f32 %v522, %v522
      %v531 = vmul.f32 %v523, %v523
      %v532 = vmul.f32 %v524, %v524
      %v533 = vmul.f32 %v525, %v525
      %v534 = vmul.f32 %v526, %v526
      %v535 = vmul.f32 %v527, %v527
      %v536 = vmul.f32 %v528, %v528
      %v537 = vmul.f32 %v529, 0.0625
      %v538 = vmul.f32 %v530, 0.0625
      %v539 = vmul.f32 %v531, 0.0625
      %v540 = vmul.f32 %v532, 0.0625
      %v541 = vmul.f32 %v533, 0.0625
      %v542 = vmul.f32 %v534, 0.0625
      %v543 = vmul.f32 %v535, 0.0625
      %v544 = vmul.f32 %v536, 0.0625
      %v545 = vadd.f32 %v512, %v537
      %v546 = vadd.f32 %v513, %v538
      %v547 = vadd.f32 %v514, %v539
      %v548 = vadd.f32 %v515, %v540
      %v549 = vadd.f32 %v516, %v541
      %v550 = vadd.f32 %v517, %v542
      %v551 = vadd.f32 %v518, %v543
      %v552 = vadd.f32 %v519, %v544
      %v553 = vmul.f32 %v529, 0.125
      %v554 = vmul.f32 %v530, 0.125
      %v555 = vmul.f32 %v531, 0.125
      %v556 = vmul.f32 %v532, 0.125
      %v557 = vmul.f32 %v533, 0.125
      %v558 = vmul.f32 %v534, 0.125
      %v559 = vmul.f32 %v535, 0.125
      %v560 = vmul.f32 %v536, 0.125
      %569 = vrot.lane.b32.xlu0 %v553, 124
      %v570 = vpop.permute.xlu0 %569
      %571 = vrot.lane.b32.xlu0 %v554, 124
      %v572 = vpop.permute.xlu0 %571
      %573 = vrot.lane.b32.xlu0 %v555, 124
      %v574 = vpop.permute.xlu0 %573
      %575 = vrot.lane.b32.xlu0 %v556, 124
      %v576 = vpop.permute.xlu0 %575
      %577 = vrot.lane.b32.xlu0 %v557, 124
      %v578 = vpop.permute.xlu0 %577
      %579 = vrot.lane.b32.xlu0 %v558, 124
      %v580 = vpop.permute.xlu0 %579
      %581 = vrot.lane.b32.xlu0 %v559, 124
      %v582 = vpop.permute.xlu0 %581
      %583 = vrot.lane.b32.xlu0 %v560, 124
      %v584 = vpop.permute.xlu0 %583
      %v593 = vadd.f32 %v545, %v570
      %v594 = vadd.f32 %v546, %v572
      %v595 = vadd.f32 %v547, %v574
      %v596 = vadd.f32 %v548, %v576
      %v597 = vadd.f32 %v549, %v578
      %v598 = vadd.f32 %v550, %v580
      %v599 = vadd.f32 %v551, %v582
      %v600 = vadd.f32 %v552, %v584
      %v601 = vld [vmem:[%s520 + $0x1] sm:$0xff]
      %v602 = vld [vmem:[%s520 + $0x11] sm:$0xff]
      %v603 = vld [vmem:[%s520 + $0x21] sm:$0xff]
      %v604 = vld [vmem:[%s520 + $0x31] sm:$0xff]
      %v605 = vld [vmem:[%s520 + $0x41] sm:$0xff]
      %v606 = vld [vmem:[%s520 + $0x51] sm:$0xff]
      %v607 = vld [vmem:[%s520 + $0x61] sm:$0xff]
      %v608 = vld [vmem:[%s520 + $0x71] sm:$0xff]
      %v609 = vmul.f32 %v601, %v601
      %v610 = vmul.f32 %v602, %v602
      %v611 = vmul.f32 %v603, %v603
      %v612 = vmul.f32 %v604, %v604
      %v613 = vmul.f32 %v605, %v605
      %v614 = vmul.f32 %v606, %v606
      %v615 = vmul.f32 %v607, %v607
      %v616 = vmul.f32 %v608, %v608
      %v617 = vmul.f32 %v609, 0.0625
      %v618 = vmul.f32 %v610, 0.0625
      %v619 = vmul.f32 %v611, 0.0625
      %v620 = vmul.f32 %v612, 0.0625
      %v621 = vmul.f32 %v613, 0.0625
      %v622 = vmul.f32 %v614, 0.0625
      %v623 = vmul.f32 %v615, 0.0625
      %v624 = vmul.f32 %v616, 0.0625
      %v625 = vadd.f32 %v593, %v617
      %v626 = vadd.f32 %v594, %v618
      %v627 = vadd.f32 %v595, %v619
      %v628 = vadd.f32 %v596, %v620
      %v629 = vadd.f32 %v597, %v621
      %v630 = vadd.f32 %v598, %v622
      %v631 = vadd.f32 %v599, %v623
      %v632 = vadd.f32 %v600, %v624
      %v633 = vadd.f32 %v625, 1e-12
      %v634 = vadd.f32 %v626, 1e-12
      %v635 = vadd.f32 %v627, 1e-12
      %v636 = vadd.f32 %v628, 1e-12
      %v637 = vadd.f32 %v629, 1e-12
      %v638 = vadd.f32 %v630, 1e-12
      %v639 = vadd.f32 %v631, 1e-12
      %v640 = vadd.f32 %v632, 1e-12
      %v641 = vrsqrt.pop %v633
      %v642 = vmul.f32 %v633, %v641
      %vm643 = vcmp.eq.f32.partialorder %v633, inf
      %v644 = vsel %vm643, %v633, %v642
      %vm645 = vcmp.eq.f32.partialorder %v633, 0.0
      %v646 = vand.u32 %v633, 2147483648
      %v647 = vsel %vm645, %v646, %v644
      %v648 = vrsqrt.pop %v634
      %v649 = vmul.f32 %v634, %v648
      %vm650 = vcmp.eq.f32.partialorder %v634, inf
      %v651 = vsel %vm650, %v634, %v649
      %vm652 = vcmp.eq.f32.partialorder %v634, 0.0
      %v653 = vand.u32 %v634, 2147483648
      %v654 = vsel %vm652, %v653, %v651
      %v655 = vrsqrt.pop %v635
      %v656 = vmul.f32 %v635, %v655
      %vm657 = vcmp.eq.f32.partialorder %v635, inf
      %v658 = vsel %vm657, %v635, %v656
      %vm659 = vcmp.eq.f32.partialorder %v635, 0.0
      %v660 = vand.u32 %v635, 2147483648
      %v661 = vsel %vm659, %v660, %v658
      %v662 = vrsqrt.pop %v636
      %v663 = vmul.f32 %v636, %v662
      %vm664 = vcmp.eq.f32.partialorder %v636, inf
      %v665 = vsel %vm664, %v636, %v663
      %vm666 = vcmp.eq.f32.partialorder %v636, 0.0
      %v667 = vand.u32 %v636, 2147483648
      %v668 = vsel %vm666, %v667, %v665
      %v669 = vrsqrt.pop %v637
      %v670 = vmul.f32 %v637, %v669
      %vm671 = vcmp.eq.f32.partialorder %v637, inf
      %v672 = vsel %vm671, %v637, %v670
      %vm673 = vcmp.eq.f32.partialorder %v637, 0.0
      %v674 = vand.u32 %v637, 2147483648
      %v675 = vsel %vm673, %v674, %v672
      %v676 = vrsqrt.pop %v638
      %v677 = vmul.f32 %v638, %v676
      %vm678 = vcmp.eq.f32.partialorder %v638, inf
      %v679 = vsel %vm678, %v638, %v677
      %vm680 = vcmp.eq.f32.partialorder %v638, 0.0
      %v681 = vand.u32 %v638, 2147483648
      %v682 = vsel %vm680, %v681, %v679
      %v683 = vrsqrt.pop %v639
      %v684 = vmul.f32 %v639, %v683
      %vm685 = vcmp.eq.f32.partialorder %v639, inf
      %v686 = vsel %vm685, %v639, %v684
      %vm687 = vcmp.eq.f32.partialorder %v639, 0.0
      %v688 = vand.u32 %v639, 2147483648
      %v689 = vsel %vm687, %v688, %v686
      %v690 = vrsqrt.pop %v640
      %v691 = vmul.f32 %v640, %v690
      %vm692 = vcmp.eq.f32.partialorder %v640, inf
      %v693 = vsel %vm692, %v640, %v691
      %vm694 = vcmp.eq.f32.partialorder %v640, 0.0
      %v695 = vand.u32 %v640, 2147483648
      %v696 = vsel %vm694, %v695, %v693
      %vm697 = vcmask 31744
      %698 = vst.msk [vmem:[%s262] sm:$0xff] %vm697, %v647
      %699 = vst.msk [vmem:[%s262 + $0x8] sm:$0xff] %vm697, %v654
      %700 = vst.msk [vmem:[%s262 + $0x10] sm:$0xff] %vm697, %v661
      %701 = vst.msk [vmem:[%s262 + $0x18] sm:$0xff] %vm697, %v668
      %702 = vst.msk [vmem:[%s262 + $0x20] sm:$0xff] %vm697, %v675
      %703 = vst.msk [vmem:[%s262 + $0x28] sm:$0xff] %vm697, %v682
      %704 = vst.msk [vmem:[%s262 + $0x30] sm:$0xff] %vm697, %v689
      %705 = vst.msk [vmem:[%s262 + $0x38] sm:$0xff] %vm697, %v696
      %s706 = smul.u32 8, %s18
      %p707 = scmp.lt.s32.totalorder %s17, 1
      %s708 = scalar_select %p707, %s17, 1
      %p709 = scmp.lt.s32.totalorder %s706, 7
      %s710 = scalar_select %p709, %s706, 7
      %s711 = smul.addr %s708, 8
      %s712 = sadd.s32 %s710, %s711
      %s713 = smul.addr %s712, 8
      %s714 = scalar_lea.vmem %s2, %s713
      // Predicated region
      $region29: #{l2pooling_pallas.1} parent=27 // pred_check
        %p715 = pneg %p105
      $region30: #{l2pooling_pallas.1} parent=27 // pred_check_branch
        %717 = sbr.rel (%p715) target = $region32
      $region31: #{l2pooling_pallas.1} parent=27 // pred_region
        %s718 = smul.u32 8, %s18
      $region32: #{l2pooling_pallas.1} parent=27 // pred_fallthru
        _
    $region28: #{l2pooling_pallas.1} parent=5 // pred_fallthru
      _
    %p719 = scmp.le.s32.totalorder 2, %s8
    // Predicated region
    $region33: #{l2pooling_pallas.1} parent=5 // pred_check
      %p720 = pneg %p719
    $region34: #{l2pooling_pallas.1} parent=5 // pred_check_branch
      %722 = sbr.rel (%p720) target = $region36
    $region35: #{l2pooling_pallas.1} parent=5 // pred_region
      %s723 = ssub.s32 %s8, 2
      // Predicated region
      $region37: #{l2pooling_pallas.1} parent=35 // pred_check
        %p724 = pneg %p111
      $region38: #{l2pooling_pallas.1} parent=35 // pred_check_branch
        %726 = sbr.rel (%p724) target = $region40
      $region39: #{l2pooling_pallas.1} parent=35 // pred_region
        %s727 = smul.u32 8, %s20
        %p728 = scmp.lt.s32.totalorder %s19, 1
        %s729 = scalar_select %p728, %s19, 1
        %p730 = scmp.lt.s32.totalorder %s727, 7
        %s731 = scalar_select %p730, %s727, 7
        %s732 = smul.addr %s729, 8
        %s733 = sadd.s32 %s731, %s732
        %s734 = smul.addr %s733, 8
        %s735 = scalar_lea.vmem %s2, %s734
      $region40: #{l2pooling_pallas.1} parent=35 // pred_fallthru
        _
    $region36: #{l2pooling_pallas.1} parent=5 // pred_fallthru
      _
  $region6: #{l2pooling_pallas.1} parent=0 // loop_footer
    %s12 = sadd.s32 1, %s8
  $region7: #{l2pooling_pallas.1} parent=0 // loop_footer_branch
    %7 = sbr.rel target = $region3
  $region8: #{l2pooling_pallas.1} parent=0 // loop_exit
    _

</llo_original>
